<compile_context>
chip_gen: v7x
topology: tpu7x:2x2x1
jax: 0.10.0
libtpu: 0.0.40
codegen_flags: <defaults>
</compile_context>

<pallas_src>
import math
import functools

import numpy as np
import jax
import jax.numpy as jnp
from jax.experimental import pallas as pl
from jax.experimental.pallas import tpu as pltpu


def _round_up(x: int, m: int) -> int:
    return ((x + m - 1) // m) * m


def _tx_kernel(q_ref, k_ref, v_ref,
               w1_ref, b1_ref, w2_ref, b2_ref,
               a1_ref, g1_ref, a2_ref, g2_ref,
               o_ref, *, d_model: int, eps: float):
    # q_ref: (TB, D)   k_ref/v_ref: (TB, T, D)   params: (1, D)/(D, dff)/(dff, D)
    q2 = q_ref[...]                                   # (TB, D)
    k3 = k_ref[...]                                   # (TB, T, D)
    v3 = v_ref[...]                                   # (TB, T, D)

    inv_sqrt_d = 1.0 / math.sqrt(d_model)

    # ---- attention: scores kept with T on the sublane axis (lane dim = 1) ----
    q3 = q2[:, None, :]                               # (TB, 1, D)
    s3 = jnp.sum(q3 * k3, axis=-1, keepdims=True) * inv_sqrt_d   # (TB, T, 1)
    m = jnp.max(s3, axis=1, keepdims=True)                        # (TB, 1, 1)
    e = jnp.exp(s3 - m)
    p3 = e / jnp.sum(e, axis=1, keepdims=True)                    # (TB, T, 1)
    A = jnp.sum(p3 * v3, axis=1)                                   # (TB, D)

    def _norm(x, alpha, bias):
        # torch: alpha * (x - mean) / (std(unbiased) + eps) + bias
        mean = jnp.mean(x, axis=-1, keepdims=True)
        xc = x - mean
        var = jnp.sum(xc * xc, axis=-1, keepdims=True) / (d_model - 1)
        std = jnp.sqrt(var)
        return alpha * xc / (std + eps) + bias

    q_ = _norm(A + q2, a1_ref[...], g1_ref[...])                   # (TB, D)

    # ---- feed-forward (weights pre-transposed to (in, out) in the wrapper) ----
    h = jnp.dot(q_, w1_ref[...], preferred_element_type=jnp.float32) + b1_ref[...]
    h = jnp.maximum(h, 0.0)                                        # (TB, dff)
    ff = jnp.dot(h, w2_ref[...], preferred_element_type=jnp.float32) + b2_ref[...]

    out = _norm(q_ + ff, a2_ref[...], g2_ref[...])                 # (TB, D)
    o_ref[...] = out.astype(o_ref.dtype)


def tx_forward(q, k, v, w1t, b1, w2t, b2, alpha1, beta1, alpha2, beta2,
               *, d_model: int, eps: float = 1e-6, batch_tile: int = 128):
    """q: (B, D)  k, v: (B, T, D)  -> out: (B, D).  All float32."""
    B, D = q.shape
    Bk, T, Dk = k.shape
    assert D == d_model and Dk == d_model and Bk == B and v.shape == k.shape
    d_ff = w1t.shape[1]
    assert w1t.shape == (D, d_ff) and w2t.shape == (d_ff, D)

    # Batch tile: multiple of 8 (sublane constraint), capped, and dividing B_pad.
    tb = min(_round_up(batch_tile, 8), _round_up(B, 8))
    B_pad = _round_up(B, tb)
    if B_pad != B:
        pad = B_pad - B
        q = jnp.pad(q, ((0, pad), (0, 0)))
        k = jnp.pad(k, ((0, pad), (0, 0), (0, 0)))
        v = jnp.pad(v, ((0, pad), (0, 0), (0, 0)))

    # 2-D-ify the 1-D parameter vectors so they live cleanly in VMEM tiles.
    b1_2d = b1.reshape(1, d_ff)
    b2_2d = b2.reshape(1, D)
    a1 = alpha1.reshape(1, D)
    g1 = beta1.reshape(1, D)
    a2 = alpha2.reshape(1, D)
    g2 = beta2.reshape(1, D)

    grid = (B_pad // tb,)
    kernel = functools.partial(_tx_kernel, d_model=d_model, eps=eps)

    out = pl.pallas_call(
        kernel,
        out_shape=jax.ShapeDtypeStruct((B_pad, D), q.dtype),
        grid_spec=pltpu.PrefetchScalarGridSpec(
            num_scalar_prefetch=0,
            grid=grid,
            in_specs=[
                pl.BlockSpec((tb, D), lambda i: (i, 0)),          # q
                pl.BlockSpec((tb, T, D), lambda i: (i, 0, 0)),    # k
                pl.BlockSpec((tb, T, D), lambda i: (i, 0, 0)),    # v
                pl.BlockSpec((D, d_ff), lambda i: (0, 0)),        # W1^T
                pl.BlockSpec((1, d_ff), lambda i: (0, 0)),        # b1
                pl.BlockSpec((d_ff, D), lambda i: (0, 0)),        # W2^T
                pl.BlockSpec((1, D), lambda i: (0, 0)),           # b2
                pl.BlockSpec((1, D), lambda i: (0, 0)),           # norm1 alpha
                pl.BlockSpec((1, D), lambda i: (0, 0)),           # norm1 bias
                pl.BlockSpec((1, D), lambda i: (0, 0)),           # norm2 alpha
                pl.BlockSpec((1, D), lambda i: (0, 0)),           # norm2 bias
            ],
            out_specs=pl.BlockSpec((tb, D), lambda i: (i, 0)),
        ),
        compiler_params=pltpu.CompilerParams(
            dimension_semantics=("parallel",),
            vmem_limit_bytes=32 * 1024 * 1024,
        ),
    )(q, k, v, w1t, b1_2d, w2t, b2_2d, a1, g1, a2, g2)

    return out[:B]


def tx_reference(q, k, v, w1t, b1, w2t, b2, alpha1, beta1, alpha2, beta2,
                 *, d_model: int, eps: float = 1e-6):
    """Pure-JAX reference reproducing the PyTorch TX.forward (eval mode)."""
    scores = jnp.sum(q[:, None, :] * k, axis=-1) / math.sqrt(d_model)   # (B, T)
    p = jax.nn.softmax(scores, axis=-1)
    A = jnp.sum(p[:, :, None] * v, axis=1)                              # (B, D)

    def norm(x, a, g):
        mean = jnp.mean(x, axis=-1, keepdims=True)
        xc = x - mean
        std = jnp.sqrt(jnp.sum(xc * xc, axis=-1, keepdims=True) / (x.shape[-1] - 1))
        return a * xc / (std + eps) + g

    q_ = norm(A + q, alpha1, beta1)
    h = jnp.maximum(q_ @ w1t + b1, 0.0)
    ff = h @ w2t + b2
    return norm(q_ + ff, alpha2, beta2)


if __name__ == "__main__":
    # Small shapes consistent with the module defaults: d_model=64, d_ff=32.
    B, T, D_MODEL = 16, 8, 64
    D_FF = D_MODEL // 2
    EPS = 1e-6

    key = jax.random.PRNGKey(0)
    (k_q, k_k, k_v, k_w1, k_b1, k_w2, k_b2,
     k_a1, k_g1, k_a2, k_g2) = jax.random.split(key, 11)

    q = jax.random.normal(k_q, (B, D_MODEL), dtype=jnp.float32)
    k = jax.random.normal(k_k, (B, T, D_MODEL), dtype=jnp.float32)
    v = jax.random.normal(k_v, (B, T, D_MODEL), dtype=jnp.float32)

    # FeedForward params (weights stored pre-transposed: (in, out); std=0.001 init).
    w1t = 0.001 * jax.random.normal(k_w1, (D_MODEL, D_FF), dtype=jnp.float32)
    b1 = 0.01 * jax.random.normal(k_b1, (D_FF,), dtype=jnp.float32)
    w2t = 0.001 * jax.random.normal(k_w2, (D_FF, D_MODEL), dtype=jnp.float32)
    b2 = 0.01 * jax.random.normal(k_b2, (D_MODEL,), dtype=jnp.float32)

    # Norm params (module init is alpha=1, bias=0; perturb slightly to exercise them).
    alpha1 = 1.0 + 0.1 * jax.random.normal(k_a1, (D_MODEL,), dtype=jnp.float32)
    beta1 = 0.1 * jax.random.normal(k_g1, (D_MODEL,), dtype=jnp.float32)
    alpha2 = 1.0 + 0.1 * jax.random.normal(k_a2, (D_MODEL,), dtype=jnp.float32)
    beta2 = 0.1 * jax.random.normal(k_g2, (D_MODEL,), dtype=jnp.float32)

    out = tx_forward(q, k, v, w1t, b1, w2t, b2, alpha1, beta1, alpha2, beta2,
                     d_model=D_MODEL, eps=EPS, batch_tile=8)
    out = jax.block_until_ready(out)

    ref = tx_reference(q, k, v, w1t, b1, w2t, b2, alpha1, beta1, alpha2, beta2,
                       d_model=D_MODEL, eps=EPS)
    np.testing.assert_allclose(np.asarray(out), np.asarray(ref), rtol=1e-4, atol=1e-5)

    print("KERNEL_OK")
</pallas_src>

<mosaic_0001>
module attributes {stable_mosaic.version = 11 : i64} {
  func.func @_tx_kernel(%arg0: i32, %arg1: memref<8x64xf32, #tpu.memory_space<vmem>>, %arg2: memref<8x8x64xf32, #tpu.memory_space<vmem>>, %arg3: memref<8x8x64xf32, #tpu.memory_space<vmem>>, %arg4: memref<64x32xf32, #tpu.memory_space<vmem>>, %arg5: memref<1x32xf32, #tpu.memory_space<vmem>>, %arg6: memref<32x64xf32, #tpu.memory_space<vmem>>, %arg7: memref<1x64xf32, #tpu.memory_space<vmem>>, %arg8: memref<1x64xf32, #tpu.memory_space<vmem>>, %arg9: memref<1x64xf32, #tpu.memory_space<vmem>>, %arg10: memref<1x64xf32, #tpu.memory_space<vmem>>, %arg11: memref<1x64xf32, #tpu.memory_space<vmem>>, %arg12: memref<8x64xf32, #tpu.memory_space<vmem>>) attributes {dimension_semantics = [#tpu.dimension_semantics<parallel>], iteration_bounds = array<i64: 2>, scalar_prefetch = 0 : i64, scratch_operands = 0 : i64, tpu.core_type = #tpu.core_type<tc>, window_params = [{transform_indices = @transform_0, window_bounds = array<i64: 8, 64>}, {transform_indices = @transform_1, window_bounds = array<i64: 8, 8, 64>}, {transform_indices = @transform_2, window_bounds = array<i64: 8, 8, 64>}, {pipeline_mode = #tpu.pipeline_mode<synchronous>, transform_indices = @transform_3, window_bounds = array<i64: 64, 32>}, {pipeline_mode = #tpu.pipeline_mode<synchronous>, transform_indices = @transform_4, window_bounds = array<i64: 1, 32>}, {pipeline_mode = #tpu.pipeline_mode<synchronous>, transform_indices = @transform_5, window_bounds = array<i64: 32, 64>}, {pipeline_mode = #tpu.pipeline_mode<synchronous>, transform_indices = @transform_6, window_bounds = array<i64: 1, 64>}, {pipeline_mode = #tpu.pipeline_mode<synchronous>, transform_indices = @transform_7, window_bounds = array<i64: 1, 64>}, {pipeline_mode = #tpu.pipeline_mode<synchronous>, transform_indices = @transform_8, window_bounds = array<i64: 1, 64>}, {pipeline_mode = #tpu.pipeline_mode<synchronous>, transform_indices = @transform_9, window_bounds = array<i64: 1, 64>}, {pipeline_mode = #tpu.pipeline_mode<synchronous>, transform_indices = @transform_10, window_bounds = array<i64: 1, 64>}, {transform_indices = @transform_11, window_bounds = array<i64: 8, 64>}]} {
    %c0 = arith.constant 0 : index
    %c0_0 = arith.constant 0 : index
    %0 = vector.load %arg1[%c0, %c0_0] : memref<8x64xf32, #tpu.memory_space<vmem>>, vector<8x64xf32>
    %c0_1 = arith.constant 0 : index
    %c0_2 = arith.constant 0 : index
    %c0_3 = arith.constant 0 : index
    %1 = vector.load %arg2[%c0_1, %c0_2, %c0_3] : memref<8x8x64xf32, #tpu.memory_space<vmem>>, vector<8x8x64xf32>
    %c0_4 = arith.constant 0 : index
    %c0_5 = arith.constant 0 : index
    %c0_6 = arith.constant 0 : index
    %2 = vector.load %arg3[%c0_4, %c0_5, %c0_6] : memref<8x8x64xf32, #tpu.memory_space<vmem>>, vector<8x8x64xf32>
    %3 = vector.shape_cast %0 : vector<8x64xf32> to vector<8x1x64xf32>
    %4 = vector.broadcast %3 : vector<8x1x64xf32> to vector<8x8x64xf32>
    %5 = arith.mulf %4, %1 : vector<8x8x64xf32>
    %cst = arith.constant dense<0.000000e+00> : vector<8x8xf32>
    %6 = vector.multi_reduction <add>, %5, %cst [2] : vector<8x8x64xf32> to vector<8x8xf32>
    %7 = vector.shape_cast %6 : vector<8x8xf32> to vector<8x8x1xf32>
    %cst_7 = arith.constant 1.250000e-01 : f32
    %8 = vector.broadcast %cst_7 : f32 to vector<8x8x1xf32>
    %9 = arith.mulf %7, %8 : vector<8x8x1xf32>
    %cst_8 = arith.constant dense<0xFF800000> : vector<8x1xf32>
    %10 = vector.multi_reduction <maximumf>, %9, %cst_8 [1] : vector<8x8x1xf32> to vector<8x1xf32>
    %11 = vector.shape_cast %10 : vector<8x1xf32> to vector<8x1x1xf32>
    %12 = vector.broadcast %11 : vector<8x1x1xf32> to vector<8x8x1xf32>
    %13 = arith.subf %9, %12 : vector<8x8x1xf32>
    %14 = math.exp %13 : vector<8x8x1xf32>
    %cst_9 = arith.constant dense<0.000000e+00> : vector<8x1xf32>
    %15 = vector.multi_reduction <add>, %14, %cst_9 [1] : vector<8x8x1xf32> to vector<8x1xf32>
    %16 = vector.shape_cast %15 : vector<8x1xf32> to vector<8x1x1xf32>
    %17 = vector.broadcast %16 : vector<8x1x1xf32> to vector<8x8x1xf32>
    %18 = arith.divf %14, %17 : vector<8x8x1xf32>
    %19 = vector.broadcast %18 : vector<8x8x1xf32> to vector<8x8x64xf32>
    %20 = arith.mulf %19, %2 : vector<8x8x64xf32>
    %cst_10 = arith.constant dense<0.000000e+00> : vector<8x64xf32>
    %21 = vector.multi_reduction <add>, %20, %cst_10 [1] : vector<8x8x64xf32> to vector<8x64xf32>
    %22 = arith.addf %21, %0 : vector<8x64xf32>
    %c0_11 = arith.constant 0 : index
    %c0_12 = arith.constant 0 : index
    %23 = vector.load %arg8[%c0_11, %c0_12] : memref<1x64xf32, #tpu.memory_space<vmem>>, vector<1x64xf32>
    %c0_13 = arith.constant 0 : index
    %c0_14 = arith.constant 0 : index
    %24 = vector.load %arg9[%c0_13, %c0_14] : memref<1x64xf32, #tpu.memory_space<vmem>>, vector<1x64xf32>
    %cst_15 = arith.constant dense<0.000000e+00> : vector<8xf32>
    %25 = vector.multi_reduction <add>, %22, %cst_15 [1] : vector<8x64xf32> to vector<8xf32>
    %26 = vector.shape_cast %25 : vector<8xf32> to vector<8x1xf32>
    %cst_16 = arith.constant 6.400000e+01 : f32
    %27 = vector.broadcast %cst_16 : f32 to vector<8x1xf32>
    %28 = arith.divf %26, %27 : vector<8x1xf32>
    %29 = vector.broadcast %28 : vector<8x1xf32> to vector<8x64xf32>
    %30 = arith.subf %22, %29 : vector<8x64xf32>
    %31 = arith.mulf %30, %30 : vector<8x64xf32>
    %cst_17 = arith.constant dense<0.000000e+00> : vector<8xf32>
    %32 = vector.multi_reduction <add>, %31, %cst_17 [1] : vector<8x64xf32> to vector<8xf32>
    %33 = vector.shape_cast %32 : vector<8xf32> to vector<8x1xf32>
    %cst_18 = arith.constant 6.300000e+01 : f32
    %34 = vector.broadcast %cst_18 : f32 to vector<8x1xf32>
    %35 = arith.divf %33, %34 : vector<8x1xf32>
    %36 = math.sqrt %35 : vector<8x1xf32>
    %37 = vector.broadcast %23 : vector<1x64xf32> to vector<8x64xf32>
    %38 = arith.mulf %37, %30 : vector<8x64xf32>
    %cst_19 = arith.constant 9.99999997E-7 : f32
    %39 = vector.broadcast %cst_19 : f32 to vector<8x1xf32>
    %40 = arith.addf %36, %39 : vector<8x1xf32>
    %41 = vector.broadcast %40 : vector<8x1xf32> to vector<8x64xf32>
    %42 = arith.divf %38, %41 : vector<8x64xf32>
    %43 = vector.broadcast %24 : vector<1x64xf32> to vector<8x64xf32>
    %44 = arith.addf %42, %43 : vector<8x64xf32>
    %c0_20 = arith.constant 0 : index
    %c0_21 = arith.constant 0 : index
    %45 = vector.load %arg4[%c0_20, %c0_21] : memref<64x32xf32, #tpu.memory_space<vmem>>, vector<64x32xf32>
    %cst_22 = arith.constant dense<0.000000e+00> : vector<8x32xf32>
    %46 = tpu.matmul %44, %45, %cst_22 {dimension_numbers = #tpu.dot_dimension_numbers<[1], [0], [0], [1], [0, 0, 1, 1], [], []>} : vector<8x64xf32>, vector<64x32xf32>, vector<8x32xf32> -> vector<8x32xf32>
    %c0_23 = arith.constant 0 : index
    %c0_24 = arith.constant 0 : index
    %47 = vector.load %arg5[%c0_23, %c0_24] : memref<1x32xf32, #tpu.memory_space<vmem>>, vector<1x32xf32>
    %48 = vector.broadcast %47 : vector<1x32xf32> to vector<8x32xf32>
    %49 = arith.addf %46, %48 : vector<8x32xf32>
    %cst_25 = arith.constant 0.000000e+00 : f32
    %50 = vector.broadcast %cst_25 : f32 to vector<8x32xf32>
    %51 = arith.maximumf %49, %50 : vector<8x32xf32>
    %c0_26 = arith.constant 0 : index
    %c0_27 = arith.constant 0 : index
    %52 = vector.load %arg6[%c0_26, %c0_27] : memref<32x64xf32, #tpu.memory_space<vmem>>, vector<32x64xf32>
    %cst_28 = arith.constant dense<0.000000e+00> : vector<8x64xf32>
    %53 = tpu.matmul %51, %52, %cst_28 {dimension_numbers = #tpu.dot_dimension_numbers<[1], [0], [0], [1], [0, 0, 1, 1], [], []>} : vector<8x32xf32>, vector<32x64xf32>, vector<8x64xf32> -> vector<8x64xf32>
    %c0_29 = arith.constant 0 : index
    %c0_30 = arith.constant 0 : index
    %54 = vector.load %arg7[%c0_29, %c0_30] : memref<1x64xf32, #tpu.memory_space<vmem>>, vector<1x64xf32>
    %55 = vector.broadcast %54 : vector<1x64xf32> to vector<8x64xf32>
    %56 = arith.addf %53, %55 : vector<8x64xf32>
    %57 = arith.addf %44, %56 : vector<8x64xf32>
    %c0_31 = arith.constant 0 : index
    %c0_32 = arith.constant 0 : index
    %58 = vector.load %arg10[%c0_31, %c0_32] : memref<1x64xf32, #tpu.memory_space<vmem>>, vector<1x64xf32>
    %c0_33 = arith.constant 0 : index
    %c0_34 = arith.constant 0 : index
    %59 = vector.load %arg11[%c0_33, %c0_34] : memref<1x64xf32, #tpu.memory_space<vmem>>, vector<1x64xf32>
    %cst_35 = arith.constant dense<0.000000e+00> : vector<8xf32>
    %60 = vector.multi_reduction <add>, %57, %cst_35 [1] : vector<8x64xf32> to vector<8xf32>
    %61 = vector.shape_cast %60 : vector<8xf32> to vector<8x1xf32>
    %cst_36 = arith.constant 6.400000e+01 : f32
    %62 = vector.broadcast %cst_36 : f32 to vector<8x1xf32>
    %63 = arith.divf %61, %62 : vector<8x1xf32>
    %64 = vector.broadcast %63 : vector<8x1xf32> to vector<8x64xf32>
    %65 = arith.subf %57, %64 : vector<8x64xf32>
    %66 = arith.mulf %65, %65 : vector<8x64xf32>
    %cst_37 = arith.constant dense<0.000000e+00> : vector<8xf32>
    %67 = vector.multi_reduction <add>, %66, %cst_37 [1] : vector<8x64xf32> to vector<8xf32>
    %68 = vector.shape_cast %67 : vector<8xf32> to vector<8x1xf32>
    %cst_38 = arith.constant 6.300000e+01 : f32
    %69 = vector.broadcast %cst_38 : f32 to vector<8x1xf32>
    %70 = arith.divf %68, %69 : vector<8x1xf32>
    %71 = math.sqrt %70 : vector<8x1xf32>
    %72 = vector.broadcast %58 : vector<1x64xf32> to vector<8x64xf32>
    %73 = arith.mulf %72, %65 : vector<8x64xf32>
    %cst_39 = arith.constant 9.99999997E-7 : f32
    %74 = vector.broadcast %cst_39 : f32 to vector<8x1xf32>
    %75 = arith.addf %71, %74 : vector<8x1xf32>
    %76 = vector.broadcast %75 : vector<8x1xf32> to vector<8x64xf32>
    %77 = arith.divf %73, %76 : vector<8x64xf32>
    %78 = vector.broadcast %59 : vector<1x64xf32> to vector<8x64xf32>
    %79 = arith.addf %77, %78 : vector<8x64xf32>
    %c0_40 = arith.constant 0 : index
    %c0_41 = arith.constant 0 : index
    %80 = vector.load %arg12[%c0_40, %c0_41] : memref<8x64xf32, #tpu.memory_space<vmem>>, vector<8x64xf32>
    tpu.vector_store %arg12[%c0_40, %c0_41], %79 {strides = array<i32>} : memref<8x64xf32, #tpu.memory_space<vmem>>, vector<8x64xf32>,
    return
  }
  func.func @transform_0(%arg0: i32) -> (i32, i32) {
    %c0_i32 = arith.constant 0 : i32
    %c0_i32_0 = arith.constant 0 : i32
    return %arg0, %c0_i32 : i32, i32
  }
  func.func @transform_1(%arg0: i32) -> (i32, i32, i32) {
    %c0_i32 = arith.constant 0 : i32
    %c0_i32_0 = arith.constant 0 : i32
    %c0_i32_1 = arith.constant 0 : i32
    return %arg0, %c0_i32, %c0_i32_0 : i32, i32, i32
  }
  func.func @transform_2(%arg0: i32) -> (i32, i32, i32) {
    %c0_i32 = arith.constant 0 : i32
    %c0_i32_0 = arith.constant 0 : i32
    %c0_i32_1 = arith.constant 0 : i32
    return %arg0, %c0_i32, %c0_i32_0 : i32, i32, i32
  }
  func.func @transform_3(%arg0: i32) -> (i32, i32) {
    %c0_i32 = arith.constant 0 : i32
    %c0_i32_0 = arith.constant 0 : i32
    %c0_i32_1 = arith.constant 0 : i32
    return %c0_i32, %c0_i32_0 : i32, i32
  }
  func.func @transform_4(%arg0: i32) -> (i32, i32) {
    %c0_i32 = arith.constant 0 : i32
    %c0_i32_0 = arith.constant 0 : i32
    %c0_i32_1 = arith.constant 0 : i32
    return %c0_i32, %c0_i32_0 : i32, i32
  }
  func.func @transform_5(%arg0: i32) -> (i32, i32) {
    %c0_i32 = arith.constant 0 : i32
    %c0_i32_0 = arith.constant 0 : i32
    %c0_i32_1 = arith.constant 0 : i32
    return %c0_i32, %c0_i32_0 : i32, i32
  }
  func.func @transform_6(%arg0: i32) -> (i32, i32) {
    %c0_i32 = arith.constant 0 : i32
    %c0_i32_0 = arith.constant 0 : i32
    %c0_i32_1 = arith.constant 0 : i32
    return %c0_i32, %c0_i32_0 : i32, i32
  }
  func.func @transform_7(%arg0: i32) -> (i32, i32) {
    %c0_i32 = arith.constant 0 : i32
    %c0_i32_0 = arith.constant 0 : i32
    %c0_i32_1 = arith.constant 0 : i32
    return %c0_i32, %c0_i32_0 : i32, i32
  }
  func.func @transform_8(%arg0: i32) -> (i32, i32) {
    %c0_i32 = arith.constant 0 : i32
    %c0_i32_0 = arith.constant 0 : i32
    %c0_i32_1 = arith.constant 0 : i32
    return %c0_i32, %c0_i32_0 : i32, i32
  }
  func.func @transform_9(%arg0: i32) -> (i32, i32) {
    %c0_i32 = arith.constant 0 : i32
    %c0_i32_0 = arith.constant 0 : i32
    %c0_i32_1 = arith.constant 0 : i32
    return %c0_i32, %c0_i32_0 : i32, i32
  }
  func.func @transform_10(%arg0: i32) -> (i32, i32) {
    %c0_i32 = arith.constant 0 : i32
    %c0_i32_0 = arith.constant 0 : i32
    %c0_i32_1 = arith.constant 0 : i32
    return %c0_i32, %c0_i32_0 : i32, i32
  }
  func.func @transform_11(%arg0: i32) -> (i32, i32) {
    %c0_i32 = arith.constant 0 : i32
    %c0_i32_0 = arith.constant 0 : i32
    return %arg0, %c0_i32 : i32, i32
  }
}

</mosaic_0001>

<llo_original>
// kernel: tpu_custom_call.1
$region0: #{tpu_custom_call.1}
  #allocation0 [shape = 'u32[]', space=smem, size = 0x4, offset = 0x4, fixed_abs, tag = 'smem constant byte address 0x4 - core index']
  #allocation1 [shape = 'u32[144,128]{1,0:T(1,128)}', space=vmem, size = 0x12000, scoped, tag = 'internal scratch']
  %s0 = inlined_call_operand.vmem [shape: f32[16,64], index: 0, kind: input, shape index: {}]
  %s1 = inlined_call_operand.hbm [shape: f32[16,8,64], index: 1, kind: input, shape index: {}]
  %s2 = inlined_call_operand.hbm [shape: f32[16,8,64], index: 2, kind: input, shape index: {}]
  %s3 = inlined_call_operand.vmem [shape: f32[64,32], index: 3, kind: input, shape index: {}]
  %s4 = inlined_call_operand.vmem [shape: f32[1,32], index: 4, kind: input, shape index: {}]
  %s5 = inlined_call_operand.vmem [shape: f32[32,64], index: 5, kind: input, shape index: {}]
  %s6 = inlined_call_operand.vmem [shape: f32[1,64], index: 6, kind: input, shape index: {}]
  %s7 = inlined_call_operand.vmem [shape: f32[1,64], index: 7, kind: input, shape index: {}]
  %s8 = inlined_call_operand.vmem [shape: f32[1,64], index: 8, kind: input, shape index: {}]
  %s9 = inlined_call_operand.vmem [shape: f32[1,64], index: 9, kind: input, shape index: {}]
  %s10 = inlined_call_operand.vmem [shape: f32[1,64], index: 10, kind: input, shape index: {}]
  %s11 = inlined_call_operand.hbm [shape: f32[16,64], index: 11, kind: output, shape index: {}]
  %s12 = sld [smem:[#allocation0]]
  $region85: #{tpu_custom_call.1} parent=0
    _
  %s14 = ssub.s32 1, %s12
  %s15 = scalar_select 0, %s14, %s12
  $region1: #{tpu_custom_call.1} parent=0
    #allocation2 [shape = 'u8[65536]{0}', space=vmem, size = 0x10000, scoped, tag = 'input window, operand 1']
    #allocation3 [shape = 's32[2]{0}', space=sflag, size = 0x8, scoped, tag = 'scoped memory for tpu_custom_call.1']
    #allocation4 [shape = 's32[2]{0}', space=sflag, size = 0x8, scoped, tag = 'scoped memory for tpu_custom_call.1']
    #allocation5 [shape = 'u8[65536]{0}', space=vmem, size = 0x10000, scoped, tag = 'input window, operand 2']
    #allocation6 [shape = 's32[2]{0}', space=sflag, size = 0x8, scoped, tag = 'scoped memory for tpu_custom_call.1']
    #allocation7 [shape = 'u8[8192]{0}', space=vmem, size = 0x2000, scoped, tag = 'output window, operand 0']
    %16 = vsyncpa [#allocation3], 0
    %s17 = scalar_lea.sflag [#allocation3], 1
    %18 = vsyncpa %s17, 0
    %19 = vsyncpa [#allocation6], 0
    %s20 = scalar_lea.sflag [#allocation6], 1
    %21 = vsyncpa %s20, 0
    %22 = vsyncpa [#allocation4], 0
    %s23 = scalar_lea.sflag [#allocation4], 1
    %24 = vsyncpa %s23, 0
    loop: start=0, step=1, limit=4
    $region2: #{tpu_custom_call.1} parent=1 // loop_pre_header
      _
    $region3: #{tpu_custom_call.1} parent=1 // loop_header
      %s26 = sphi 0, %s30
      %p27 = scmp.ge.s32.totalorder %s26, 4
      %s36 = sphi 0, %s38
      %s39 = sphi 0, %s36
      %s40 = sphi 0, %s39
      %s56 = sphi 0, %s40
      %s62 = sphi 0, %s64
      %s65 = sphi 0, %s62
      %s66 = sphi 0, %s65
      %s82 = sphi 0, %s66
      %s88 = sphi 0, %s90
      %s91 = sphi 0, %s88
      %s92 = sphi 0, %s91
      %s108 = sphi 0, %s92
      %s112 = sphi 0, %s112
      %s114 = sphi 0, %s112
      %s115 = sphi 0, %s114
      %s129 = sphi 0, %s115
      %s133 = sphi 0, %s133
      %s135 = sphi 0, %s133
      %s136 = sphi 0, %s135
      %s150 = sphi 0, %s136
      %s154 = sphi 0, %s154
      %s156 = sphi 0, %s154
      %s157 = sphi 0, %s156
      %s171 = sphi 0, %s157
      %s175 = sphi 0, %s175
      %s177 = sphi 0, %s175
      %s178 = sphi 0, %s177
      %s192 = sphi 0, %s178
      %s196 = sphi 0, %s196
      %s198 = sphi 0, %s196
      %s199 = sphi 0, %s198
      %s213 = sphi 0, %s199
      %s217 = sphi 0, %s217
      %s219 = sphi 0, %s217
      %s220 = sphi 0, %s219
      %s234 = sphi 0, %s220
      %s238 = sphi 0, %s238
      %s240 = sphi 0, %s238
      %s241 = sphi 0, %s240
      %s255 = sphi 0, %s241
      %s259 = sphi 0, %s259
      %s261 = sphi 0, %s259
      %s262 = sphi 0, %s261
      %s276 = sphi 0, %s262
      %s282 = sphi 0, %s284
      %s285 = sphi 0, %s282
      %s286 = sphi 0, %s285
      %s302 = sphi 0, %s286
    $region4: #{tpu_custom_call.1} parent=1 // loop_header_branch
      %29 = sbr.rel (%p27) target = $region8
    $region5: #{tpu_custom_call.1} parent=1 // loop_body
      %s31 = ssub.s32 %s26, 1
      %s32 = ssub.s32 %s26, 2
      %s33 = sadd.s32 %s26, 1
      %s34 = ssub.s32 %s26, %s33
      %p35 = scmp.eq.s32.totalorder %s34, 0
      %s37 = sadd.s32 %s36, 1
      %s38 = scalar_select %p35, %s36, %s37
      %p41 = pneg %p35
      %p42 = scmp.eq.s32.totalorder %s26, 1
      %p43 = por %p41, %p42
      %p44 = scmp.ne.s32.totalorder %s36, %s39
      %p45 = scmp.eq.s32.totalorder %s26, 0
      %p46 = por %p44, %p45
      %p47 = scmp.ne.s32.totalorder %s36, %s39
      %p48 = scmp.eq.s32.totalorder %s31, 1
      %p49 = por %p47, %p48
      %p50 = scmp.ne.s32.totalorder %s39, %s40
      %p51 = scmp.eq.s32.totalorder %s31, 0
      %p52 = por %p50, %p51
      %p53 = scmp.ne.s32.totalorder %s39, %s40
      %p54 = scmp.eq.s32.totalorder %s32, 1
      %p55 = por %p53, %p54
      %p57 = scmp.ne.s32.totalorder %s40, %s56
      %p58 = scmp.eq.s32.totalorder %s32, 0
      %p59 = por %p57, %p58
      %s60 = ssub.s32 %s26, %s33
      %p61 = scmp.eq.s32.totalorder %s60, 0
      %s63 = sadd.s32 %s62, 1
      %s64 = scalar_select %p61, %s62, %s63
      %p67 = pneg %p61
      %p68 = scmp.eq.s32.totalorder %s26, 1
      %p69 = por %p67, %p68
      %p70 = scmp.ne.s32.totalorder %s62, %s65
      %p71 = scmp.eq.s32.totalorder %s26, 0
      %p72 = por %p70, %p71
      %p73 = scmp.ne.s32.totalorder %s62, %s65
      %p74 = scmp.eq.s32.totalorder %s31, 1
      %p75 = por %p73, %p74
      %p76 = scmp.ne.s32.totalorder %s65, %s66
      %p77 = scmp.eq.s32.totalorder %s31, 0
      %p78 = por %p76, %p77
      %p79 = scmp.ne.s32.totalorder %s65, %s66
      %p80 = scmp.eq.s32.totalorder %s32, 1
      %p81 = por %p79, %p80
      %p83 = scmp.ne.s32.totalorder %s66, %s82
      %p84 = scmp.eq.s32.totalorder %s32, 0
      %p85 = por %p83, %p84
      %s86 = ssub.s32 %s26, %s33
      %p87 = scmp.eq.s32.totalorder %s86, 0
      %s89 = sadd.s32 %s88, 1
      %s90 = scalar_select %p87, %s88, %s89
      %p93 = pneg %p87
      %p94 = scmp.eq.s32.totalorder %s26, 1
      %p95 = por %p93, %p94
      %p96 = scmp.ne.s32.totalorder %s88, %s91
      %p97 = scmp.eq.s32.totalorder %s26, 0
      %p98 = por %p96, %p97
      %p99 = scmp.ne.s32.totalorder %s88, %s91
      %p100 = scmp.eq.s32.totalorder %s31, 1
      %p101 = por %p99, %p100
      %p102 = scmp.ne.s32.totalorder %s91, %s92
      %p103 = scmp.eq.s32.totalorder %s31, 0
      %p104 = por %p102, %p103
      %p105 = scmp.ne.s32.totalorder %s91, %s92
      %p106 = scmp.eq.s32.totalorder %s32, 1
      %p107 = por %p105, %p106
      %p109 = scmp.ne.s32.totalorder %s92, %s108
      %p110 = scmp.eq.s32.totalorder %s32, 0
      %p111 = por %p109, %p110
      %s113 = sadd.s32 %s112, 1
      %p116 = scmp.eq.s32.totalorder %s26, 1
      %p117 = scmp.ne.s32.totalorder %s112, %s114
      %p118 = scmp.eq.s32.totalorder %s26, 0
      %p119 = por %p117, %p118
      %p120 = scmp.ne.s32.totalorder %s112, %s114
      %p121 = scmp.eq.s32.totalorder %s31, 1
      %p122 = por %p120, %p121
      %p123 = scmp.ne.s32.totalorder %s114, %s115
      %p124 = scmp.eq.s32.totalorder %s31, 0
      %p125 = por %p123, %p124
      %p126 = scmp.ne.s32.totalorder %s114, %s115
      %p127 = scmp.eq.s32.totalorder %s32, 1
      %p128 = por %p126, %p127
      %p130 = scmp.ne.s32.totalorder %s115, %s129
      %p131 = scmp.eq.s32.totalorder %s32, 0
      %p132 = por %p130, %p131
      %s134 = sadd.s32 %s133, 1
      %p137 = scmp.eq.s32.totalorder %s26, 1
      %p138 = scmp.ne.s32.totalorder %s133, %s135
      %p139 = scmp.eq.s32.totalorder %s26, 0
      %p140 = por %p138, %p139
      %p141 = scmp.ne.s32.totalorder %s133, %s135
      %p142 = scmp.eq.s32.totalorder %s31, 1
      %p143 = por %p141, %p142
      %p144 = scmp.ne.s32.totalorder %s135, %s136
      %p145 = scmp.eq.s32.totalorder %s31, 0
      %p146 = por %p144, %p145
      %p147 = scmp.ne.s32.totalorder %s135, %s136
      %p148 = scmp.eq.s32.totalorder %s32, 1
      %p149 = por %p147, %p148
      %p151 = scmp.ne.s32.totalorder %s136, %s150
      %p152 = scmp.eq.s32.totalorder %s32, 0
      %p153 = por %p151, %p152
      %s155 = sadd.s32 %s154, 1
      %p158 = scmp.eq.s32.totalorder %s26, 1
      %p159 = scmp.ne.s32.totalorder %s154, %s156
      %p160 = scmp.eq.s32.totalorder %s26, 0
      %p161 = por %p159, %p160
      %p162 = scmp.ne.s32.totalorder %s154, %s156
      %p163 = scmp.eq.s32.totalorder %s31, 1
      %p164 = por %p162, %p163
      %p165 = scmp.ne.s32.totalorder %s156, %s157
      %p166 = scmp.eq.s32.totalorder %s31, 0
      %p167 = por %p165, %p166
      %p168 = scmp.ne.s32.totalorder %s156, %s157
      %p169 = scmp.eq.s32.totalorder %s32, 1
      %p170 = por %p168, %p169
      %p172 = scmp.ne.s32.totalorder %s157, %s171
      %p173 = scmp.eq.s32.totalorder %s32, 0
      %p174 = por %p172, %p173
      %s176 = sadd.s32 %s175, 1
      %p179 = scmp.eq.s32.totalorder %s26, 1
      %p180 = scmp.ne.s32.totalorder %s175, %s177
      %p181 = scmp.eq.s32.totalorder %s26, 0
      %p182 = por %p180, %p181
      %p183 = scmp.ne.s32.totalorder %s175, %s177
      %p184 = scmp.eq.s32.totalorder %s31, 1
      %p185 = por %p183, %p184
      %p186 = scmp.ne.s32.totalorder %s177, %s178
      %p187 = scmp.eq.s32.totalorder %s31, 0
      %p188 = por %p186, %p187
      %p189 = scmp.ne.s32.totalorder %s177, %s178
      %p190 = scmp.eq.s32.totalorder %s32, 1
      %p191 = por %p189, %p190
      %p193 = scmp.ne.s32.totalorder %s178, %s192
      %p194 = scmp.eq.s32.totalorder %s32, 0
      %p195 = por %p193, %p194
      %s197 = sadd.s32 %s196, 1
      %p200 = scmp.eq.s32.totalorder %s26, 1
      %p201 = scmp.ne.s32.totalorder %s196, %s198
      %p202 = scmp.eq.s32.totalorder %s26, 0
      %p203 = por %p201, %p202
      %p204 = scmp.ne.s32.totalorder %s196, %s198
      %p205 = scmp.eq.s32.totalorder %s31, 1
      %p206 = por %p204, %p205
      %p207 = scmp.ne.s32.totalorder %s198, %s199
      %p208 = scmp.eq.s32.totalorder %s31, 0
      %p209 = por %p207, %p208
      %p210 = scmp.ne.s32.totalorder %s198, %s199
      %p211 = scmp.eq.s32.totalorder %s32, 1
      %p212 = por %p210, %p211
      %p214 = scmp.ne.s32.totalorder %s199, %s213
      %p215 = scmp.eq.s32.totalorder %s32, 0
      %p216 = por %p214, %p215
      %s218 = sadd.s32 %s217, 1
      %p221 = scmp.eq.s32.totalorder %s26, 1
      %p222 = scmp.ne.s32.totalorder %s217, %s219
      %p223 = scmp.eq.s32.totalorder %s26, 0
      %p224 = por %p222, %p223
      %p225 = scmp.ne.s32.totalorder %s217, %s219
      %p226 = scmp.eq.s32.totalorder %s31, 1
      %p227 = por %p225, %p226
      %p228 = scmp.ne.s32.totalorder %s219, %s220
      %p229 = scmp.eq.s32.totalorder %s31, 0
      %p230 = por %p228, %p229
      %p231 = scmp.ne.s32.totalorder %s219, %s220
      %p232 = scmp.eq.s32.totalorder %s32, 1
      %p233 = por %p231, %p232
      %p235 = scmp.ne.s32.totalorder %s220, %s234
      %p236 = scmp.eq.s32.totalorder %s32, 0
      %p237 = por %p235, %p236
      %s239 = sadd.s32 %s238, 1
      %p242 = scmp.eq.s32.totalorder %s26, 1
      %p243 = scmp.ne.s32.totalorder %s238, %s240
      %p244 = scmp.eq.s32.totalorder %s26, 0
      %p245 = por %p243, %p244
      %p246 = scmp.ne.s32.totalorder %s238, %s240
      %p247 = scmp.eq.s32.totalorder %s31, 1
      %p248 = por %p246, %p247
      %p249 = scmp.ne.s32.totalorder %s240, %s241
      %p250 = scmp.eq.s32.totalorder %s31, 0
      %p251 = por %p249, %p250
      %p252 = scmp.ne.s32.totalorder %s240, %s241
      %p253 = scmp.eq.s32.totalorder %s32, 1
      %p254 = por %p252, %p253
      %p256 = scmp.ne.s32.totalorder %s241, %s255
      %p257 = scmp.eq.s32.totalorder %s32, 0
      %p258 = por %p256, %p257
      %s260 = sadd.s32 %s259, 1
      %p263 = scmp.eq.s32.totalorder %s26, 1
      %p264 = scmp.ne.s32.totalorder %s259, %s261
      %p265 = scmp.eq.s32.totalorder %s26, 0
      %p266 = por %p264, %p265
      %p267 = scmp.ne.s32.totalorder %s259, %s261
      %p268 = scmp.eq.s32.totalorder %s31, 1
      %p269 = por %p267, %p268
      %p270 = scmp.ne.s32.totalorder %s261, %s262
      %p271 = scmp.eq.s32.totalorder %s31, 0
      %p272 = por %p270, %p271
      %p273 = scmp.ne.s32.totalorder %s261, %s262
      %p274 = scmp.eq.s32.totalorder %s32, 1
      %p275 = por %p273, %p274
      %p277 = scmp.ne.s32.totalorder %s262, %s276
      %p278 = scmp.eq.s32.totalorder %s32, 0
      %p279 = por %p277, %p278
      %s280 = ssub.s32 %s26, %s33
      %p281 = scmp.eq.s32.totalorder %s280, 0
      %s283 = sadd.s32 %s282, 1
      %s284 = scalar_select %p281, %s282, %s283
      %p287 = pneg %p281
      %p288 = scmp.eq.s32.totalorder %s26, 1
      %p289 = por %p287, %p288
      %p290 = scmp.ne.s32.totalorder %s282, %s285
      %p291 = scmp.eq.s32.totalorder %s26, 0
      %p292 = por %p290, %p291
      %p293 = scmp.ne.s32.totalorder %s282, %s285
      %p294 = scmp.eq.s32.totalorder %s31, 1
      %p295 = por %p293, %p294
      %p296 = scmp.ne.s32.totalorder %s285, %s286
      %p297 = scmp.eq.s32.totalorder %s31, 0
      %p298 = por %p296, %p297
      %p299 = scmp.ne.s32.totalorder %s285, %s286
      %p300 = scmp.eq.s32.totalorder %s32, 1
      %p301 = por %p299, %p300
      %p303 = scmp.ne.s32.totalorder %s286, %s302
      %p304 = scmp.eq.s32.totalorder %s32, 0
      %p305 = por %p303, %p304
      %p306 = scmp.le.s32.totalorder 1, %s26
      %p307 = scmp.lt.s32.totalorder %s26, 3
      %p308 = pnand %p306, %p307
      %p309 = pneg %p308
      // Predicated region
      $region9: #{tpu_custom_call.1} parent=5 // pred_check
        _
      $region10: #{tpu_custom_call.1} parent=5 // pred_check_branch
        %311 = sbr.rel (%p308) target = $region12
      $region11: #{tpu_custom_call.1} parent=5 // pred_region
        %s312 = ssub.s32 %s26, 1
        // Predicated region
        $region13: #{tpu_custom_call.1} parent=11 // pred_check
          %p313 = pneg %p125
        $region14: #{tpu_custom_call.1} parent=11 // pred_check_branch
          %315 = sbr.rel (%p313) target = $region16
        $region15: #{tpu_custom_call.1} parent=11 // pred_region
          _
        $region16: #{tpu_custom_call.1} parent=11 // pred_fallthru
          _
        // Predicated region
        $region17: #{tpu_custom_call.1} parent=11 // pred_check
          %p316 = pneg %p146
        $region18: #{tpu_custom_call.1} parent=11 // pred_check_branch
          %318 = sbr.rel (%p316) target = $region20
        $region19: #{tpu_custom_call.1} parent=11 // pred_region
          _
        $region20: #{tpu_custom_call.1} parent=11 // pred_fallthru
          _
        // Predicated region
        $region21: #{tpu_custom_call.1} parent=11 // pred_check
          %p319 = pneg %p167
        $region22: #{tpu_custom_call.1} parent=11 // pred_check_branch
          %321 = sbr.rel (%p319) target = $region24
        $region23: #{tpu_custom_call.1} parent=11 // pred_region
          _
        $region24: #{tpu_custom_call.1} parent=11 // pred_fallthru
          _
        // Predicated region
        $region25: #{tpu_custom_call.1} parent=11 // pred_check
          %p322 = pneg %p188
        $region26: #{tpu_custom_call.1} parent=11 // pred_check_branch
          %324 = sbr.rel (%p322) target = $region28
        $region27: #{tpu_custom_call.1} parent=11 // pred_region
          _
        $region28: #{tpu_custom_call.1} parent=11 // pred_fallthru
          _
        // Predicated region
        $region29: #{tpu_custom_call.1} parent=11 // pred_check
          %p325 = pneg %p209
        $region30: #{tpu_custom_call.1} parent=11 // pred_check_branch
          %327 = sbr.rel (%p325) target = $region32
        $region31: #{tpu_custom_call.1} parent=11 // pred_region
          _
        $region32: #{tpu_custom_call.1} parent=11 // pred_fallthru
          _
        // Predicated region
        $region33: #{tpu_custom_call.1} parent=11 // pred_check
          %p328 = pneg %p230
        $region34: #{tpu_custom_call.1} parent=11 // pred_check_branch
          %330 = sbr.rel (%p328) target = $region36
        $region35: #{tpu_custom_call.1} parent=11 // pred_region
          _
        $region36: #{tpu_custom_call.1} parent=11 // pred_fallthru
          _
        // Predicated region
        $region37: #{tpu_custom_call.1} parent=11 // pred_check
          %p331 = pneg %p251
        $region38: #{tpu_custom_call.1} parent=11 // pred_check_branch
          %333 = sbr.rel (%p331) target = $region40
        $region39: #{tpu_custom_call.1} parent=11 // pred_region
          _
        $region40: #{tpu_custom_call.1} parent=11 // pred_fallthru
          _
        // Predicated region
        $region41: #{tpu_custom_call.1} parent=11 // pred_check
          %p334 = pneg %p272
        $region42: #{tpu_custom_call.1} parent=11 // pred_check_branch
          %336 = sbr.rel (%p334) target = $region44
        $region43: #{tpu_custom_call.1} parent=11 // pred_region
          _
        $region44: #{tpu_custom_call.1} parent=11 // pred_fallthru
          _
      $region12: #{tpu_custom_call.1} parent=5 // pred_fallthru
        _
      %p337 = scmp.lt.s32.totalorder %s26, 2
      // Predicated region
      $region45: #{tpu_custom_call.1} parent=5 // pred_check
        %p338 = pneg %p337
      $region46: #{tpu_custom_call.1} parent=5 // pred_check_branch
        %340 = sbr.rel (%p338) target = $region48
      $region47: #{tpu_custom_call.1} parent=5 // pred_region
        // Predicated region
        $region49: #{tpu_custom_call.1} parent=47 // pred_check
          %p341 = pneg %p46
        $region50: #{tpu_custom_call.1} parent=47 // pred_check_branch
          %343 = sbr.rel (%p341) target = $region52
        $region51: #{tpu_custom_call.1} parent=47 // pred_region
          %p344 = scmp.lt.s32.totalorder %s26, 1
          %s345 = scalar_select %p344, %s26, 1
          %s346 = smul.addr %s345, 8
          %s347 = scalar_lea.vmem %s0, %s346
        $region52: #{tpu_custom_call.1} parent=47 // pred_fallthru
          _
        // Predicated region
        $region53: #{tpu_custom_call.1} parent=47 // pred_check
          %p348 = pneg %p72
        $region54: #{tpu_custom_call.1} parent=47 // pred_check_branch
          %350 = sbr.rel (%p348) target = $region56
        $region55: #{tpu_custom_call.1} parent=47 // pred_region
          %s351 = sand.u32 %s62, 1
          %s352 = scalar_lea.sflag [#allocation3], %s351
          %s353 = sand.u32 %s62, 1
          %s354 = smul.addr %s353, 64
          %s355 = scalar_lea.vmem [#allocation2], %s354
          %s356 = smul.u32 8, %s26
          %s358 = ssub.s32 1024, 1024
          %359 = vsyncadd %s352, %s358
          %s360 = smul.addr %s356, 128
          %s361 = scalar_lea.hbm %s1, %s360
          %s362 = sshll.u32 %s355, 4
          %s363 = int_to_ptr.vmem [resolvable:$true] %s362
          %368 = dma.hbm_to_vmem [thread:$0]  %s361, 1024, %s363, %s352, 128, 128, 8
        $region56: #{tpu_custom_call.1} parent=47 // pred_fallthru
          _
        // Predicated region
        $region57: #{tpu_custom_call.1} parent=47 // pred_check
          %p369 = pneg %p98
        $region58: #{tpu_custom_call.1} parent=47 // pred_check_branch
          %371 = sbr.rel (%p369) target = $region60
        $region59: #{tpu_custom_call.1} parent=47 // pred_region
          %s372 = sand.u32 %s88, 1
          %s373 = scalar_lea.sflag [#allocation6], %s372
          %s374 = sand.u32 %s88, 1
          %s375 = smul.addr %s374, 64
          %s376 = scalar_lea.vmem [#allocation5], %s375
          %s377 = smul.u32 8, %s26
          %s379 = ssub.s32 1024, 1024
          %380 = vsyncadd %s373, %s379
          %s381 = smul.addr %s377, 128
          %s382 = scalar_lea.hbm %s2, %s381
          %s383 = sshll.u32 %s376, 4
          %s384 = int_to_ptr.vmem [resolvable:$true] %s383
          %389 = dma.hbm_to_vmem [thread:$0]  %s382, 1024, %s384, %s373, 128, 128, 8
        $region60: #{tpu_custom_call.1} parent=47 // pred_fallthru
          _
      $region48: #{tpu_custom_call.1} parent=5 // pred_fallthru
        _
      %p390 = scmp.le.s32.totalorder 1, %s26
      %p391 = scmp.lt.s32.totalorder %s26, 3
      %p392 = pnand %p390, %p391
      %p393 = pneg %p392
      // Predicated region
      $region61: #{tpu_custom_call.1} parent=5 // pred_check
        _
      $region62: #{tpu_custom_call.1} parent=5 // pred_check_branch
        %395 = sbr.rel (%p392) target = $region64
      $region63: #{tpu_custom_call.1} parent=5 // pred_region
        %s396 = ssub.s32 %s26, 1
        %s397 = sand.u32 %s65, 1
        %s398 = scalar_lea.sflag [#allocation3], %s397
        %s399 = sand.u32 %s65, 1
        %s400 = smul.addr %s399, 64
        %s401 = scalar_lea.vmem [#allocation2], %s400
        // Predicated region
        $region65: #{tpu_custom_call.1} parent=63 // pred_check
          %p402 = pneg %p78
        $region66: #{tpu_custom_call.1} parent=63 // pred_check_branch
          %404 = sbr.rel (%p402) target = $region68
        $region67: #{tpu_custom_call.1} parent=63 // pred_region
          %405 = dma.done %s398, 1024
        $region68: #{tpu_custom_call.1} parent=63 // pred_fallthru
          _
        %s406 = sand.u32 %s91, 1
        %s407 = scalar_lea.sflag [#allocation6], %s406
        %s408 = sand.u32 %s91, 1
        %s409 = smul.addr %s408, 64
        %s410 = scalar_lea.vmem [#allocation5], %s409
        // Predicated region
        $region69: #{tpu_custom_call.1} parent=63 // pred_check
          %p411 = pneg %p104
        $region70: #{tpu_custom_call.1} parent=63 // pred_check_branch
          %413 = sbr.rel (%p411) target = $region72
        $region71: #{tpu_custom_call.1} parent=63 // pred_region
          %414 = dma.done %s407, 1024
        $region72: #{tpu_custom_call.1} parent=63 // pred_fallthru
          _
        %p415 = scmp.lt.s32.totalorder %s31, 1
        %s416 = scalar_select %p415, %s31, 1
        %s417 = smul.addr %s416, 8
        %s418 = scalar_lea.vmem %s0, %s417
        %p419 = pneg %p52
        %p420 = pneg %p49
        %s421 = sand.u32 %s65, 1
        %s422 = scalar_lea.sflag [#allocation3], %s421
        %s423 = sand.u32 %s65, 1
        %s424 = smul.addr %s423, 64
        %s425 = scalar_lea.vmem [#allocation2], %s424
        %p426 = pneg %p78
        %p427 = pneg %p75
        %s428 = sand.u32 %s91, 1
        %s429 = scalar_lea.sflag [#allocation6], %s428
        %s430 = sand.u32 %s91, 1
        %s431 = smul.addr %s430, 64
        %s432 = scalar_lea.vmem [#allocation5], %s431
        %p433 = pneg %p104
        %p434 = pneg %p101
        %p435 = pneg %p125
        %p436 = pneg %p122
        %p437 = pneg %p146
        %p438 = pneg %p143
        %p439 = pneg %p167
        %p440 = pneg %p164
        %p441 = pneg %p188
        %p442 = pneg %p185
        %p443 = pneg %p209
        %p444 = pneg %p206
        %p445 = pneg %p230
        %p446 = pneg %p227
        %p447 = pneg %p251
        %p448 = pneg %p248
        %p449 = pneg %p272
        %p450 = pneg %p269
        %p451 = pneg %p298
        %p452 = pneg %p295
        %s453 = sand.u32 %s285, 1
        %s454 = scalar_lea.sflag [#allocation4], %s453
        %s455 = sand.u32 %s285, 1
        %s456 = smul.addr %s455, 8
        %s457 = scalar_lea.vmem [#allocation7], %s456
        %p458 = scmp.lt.s32.totalorder %s31, 1
        %s459 = scalar_select %p458, %s31, 1
        %s460 = smul.addr %s459, 8
        %s461 = scalar_lea.vmem %s0, %s460
        %s462 = smul.u32 8, %s31
        %s463 = smul.u32 8, %s31
        %v464 = vld [vmem:[%s461] sm:$0xff]
        %v465 = vld [vmem:[%s401] sm:$0xff]
        %v466 = vld [vmem:[%s401 + $0x8] sm:$0xff]
        %v467 = vld [vmem:[%s401 + $0x10] sm:$0xff]
        %v468 = vld [vmem:[%s401 + $0x18] sm:$0xff]
        %v469 = vld [vmem:[%s401 + $0x20] sm:$0xff]
        %v470 = vld [vmem:[%s401 + $0x28] sm:$0xff]
        %v471 = vld [vmem:[%s401 + $0x30] sm:$0xff]
        %v472 = vld [vmem:[%s401 + $0x38] sm:$0xff]
        %v473 = vld [vmem:[%s410] sm:$0xff]
        %v474 = vld [vmem:[%s410 + $0x8] sm:$0xff]
        %v475 = vld [vmem:[%s410 + $0x10] sm:$0xff]
        %v476 = vld [vmem:[%s410 + $0x18] sm:$0xff]
        %v477 = vld [vmem:[%s410 + $0x20] sm:$0xff]
        %v478 = vld [vmem:[%s410 + $0x28] sm:$0xff]
        %v479 = vld [vmem:[%s410 + $0x30] sm:$0xff]
        %v480 = vld [vmem:[%s410 + $0x38] sm:$0xff]
        %v482 = vcombine.high %v464, %v464
        %v484 = vunpack.c.l.s4 1966171168
        %v485 = vunpack.c.0.s8 %v484
        %v486 = vlaneseq
        %v487 = vshrl.u32 %v486, 7
        %v488 = vsub.s32 %v485, %v487
        %v489 = vrot.slane %v464, %v488
        %v491 = vunpack.c.l.s4 1966171168
        %v492 = vunpack.c.0.s8 %v491
        %v493 = vlaneseq
        %v494 = vshrl.u32 %v493, 7
        %v495 = vsub.s32 %v492, %v494
        %v496 = vrot.slane %v482, %v495
        %v497 = vcombine.high %v489, %v489
        %v498 = vcombine.high %v496, %v496
        %v500 = vunpack.c.l.s4 1966171168
        %v501 = vunpack.c.0.s8 %v500
        %v502 = vlaneseq
        %v503 = vshrl.u32 %v502, 7
        %v504 = vsub.s32 %v501, %v503
        %v505 = vrot.slane %v489, %v504
        %v507 = vunpack.c.l.s4 1966171168
        %v508 = vunpack.c.0.s8 %v507
        %v509 = vlaneseq
        %v510 = vshrl.u32 %v509, 7
        %v511 = vsub.s32 %v508, %v510
        %v512 = vrot.slane %v496, %v511
        %v514 = vunpack.c.l.s4 1966171168
        %v515 = vunpack.c.0.s8 %v514
        %v516 = vlaneseq
        %v517 = vshrl.u32 %v516, 7
        %v518 = vsub.s32 %v515, %v517
        %v519 = vrot.slane %v497, %v518
        %v521 = vunpack.c.l.s4 1966171168
        %v522 = vunpack.c.0.s8 %v521
        %v523 = vlaneseq
        %v524 = vshrl.u32 %v523, 7
        %v525 = vsub.s32 %v522, %v524
        %v526 = vrot.slane %v498, %v525
        %v527 = vcombine.high %v505, %v505
        %v528 = vcombine.high %v512, %v512
        %v529 = vcombine.high %v519, %v519
        %v530 = vcombine.high %v526, %v526
        %v531 = vlaneseq
        %v532 = vshrl.u32 %v531, 7
        %v533 = vsub.s32 0, %v532
        %v534 = vrot.slane %v505, %v533
        %v535 = vlaneseq
        %v536 = vshrl.u32 %v535, 7
        %v537 = vsub.s32 0, %v536
        %v538 = vrot.slane %v519, %v537
        %v539 = vlaneseq
        %v540 = vshrl.u32 %v539, 7
        %v541 = vsub.s32 0, %v540
        %v542 = vrot.slane %v527, %v541
        %v543 = vlaneseq
        %v544 = vshrl.u32 %v543, 7
        %v545 = vsub.s32 0, %v544
        %v546 = vrot.slane %v529, %v545
        %v547 = vlaneseq
        %v548 = vshrl.u32 %v547, 7
        %v549 = vsub.s32 0, %v548
        %v550 = vrot.slane %v512, %v549
        %v551 = vlaneseq
        %v552 = vshrl.u32 %v551, 7
        %v553 = vsub.s32 0, %v552
        %v554 = vrot.slane %v526, %v553
        %v555 = vlaneseq
        %v556 = vshrl.u32 %v555, 7
        %v557 = vsub.s32 0, %v556
        %v558 = vrot.slane %v528, %v557
        %v559 = vlaneseq
        %v560 = vshrl.u32 %v559, 7
        %v561 = vsub.s32 0, %v560
        %v562 = vrot.slane %v530, %v561
        %v571 = vmul.f32 %v534, %v465
        %v572 = vmul.f32 %v538, %v466
        %v573 = vmul.f32 %v542, %v467
        %v574 = vmul.f32 %v546, %v468
        %v575 = vmul.f32 %v550, %v469
        %v576 = vmul.f32 %v554, %v470
        %v577 = vmul.f32 %v558, %v471
        %v578 = vmul.f32 %v562, %v472
        %vm579 = vcmask 523264
        %v580 = vsel %vm579, %v571, 0.0
        %581 = vadd.xlane.f32.xlu0 %v580
        %v582 = vpop.xlane.xlu0 %581
        %v583 = vsel %vm579, %v572, 0.0
        %584 = vadd.xlane.f32.xlu0 %v583
        %v585 = vpop.xlane.xlu0 %584
        %v586 = vsel %vm579, %v573, 0.0
        %587 = vadd.xlane.f32.xlu0 %v586
        %v588 = vpop.xlane.xlu0 %587
        %v589 = vsel %vm579, %v574, 0.0
        %590 = vadd.xlane.f32.xlu0 %v589
        %v591 = vpop.xlane.xlu0 %590
        %v592 = vsel %vm579, %v575, 0.0
        %593 = vadd.xlane.f32.xlu0 %v592
        %v594 = vpop.xlane.xlu0 %593
        %v595 = vsel %vm579, %v576, 0.0
        %596 = vadd.xlane.f32.xlu0 %v595
        %v597 = vpop.xlane.xlu0 %596
        %v598 = vsel %vm579, %v577, 0.0
        %599 = vadd.xlane.f32.xlu0 %v598
        %v600 = vpop.xlane.xlu0 %599
        %v601 = vsel %vm579, %v578, 0.0
        %602 = vadd.xlane.f32.xlu0 %v601
        %v603 = vpop.xlane.xlu0 %602
        %v604 = vmul.f32 %v582, 0.125
        %v605 = vmul.f32 %v585, 0.125
        %v606 = vmul.f32 %v588, 0.125
        %v607 = vmul.f32 %v591, 0.125
        %v608 = vmul.f32 %v594, 0.125
        %v609 = vmul.f32 %v597, 0.125
        %v610 = vmul.f32 %v600, 0.125
        %v611 = vmul.f32 %v603, 0.125
        %v612 = vrot.slane %v604, 4
        %v613 = vmax.f32 %v604, %v612
        %v614 = vrot.slane %v613, 2
        %v615 = vmax.f32 %v613, %v614
        %v616 = vrot.slane %v615, 1
        %v617 = vmax.f32 %v615, %v616
        %v618 = vrot.slane %v605, 4
        %v619 = vmax.f32 %v605, %v618
        %v620 = vrot.slane %v619, 2
        %v621 = vmax.f32 %v619, %v620
        %v622 = vrot.slane %v621, 1
        %v623 = vmax.f32 %v621, %v622
        %v624 = vrot.slane %v606, 4
        %v625 = vmax.f32 %v606, %v624
        %v626 = vrot.slane %v625, 2
        %v627 = vmax.f32 %v625, %v626
        %v628 = vrot.slane %v627, 1
        %v629 = vmax.f32 %v627, %v628
        %v630 = vrot.slane %v607, 4
        %v631 = vmax.f32 %v607, %v630
        %v632 = vrot.slane %v631, 2
        %v633 = vmax.f32 %v631, %v632
        %v634 = vrot.slane %v633, 1
        %v635 = vmax.f32 %v633, %v634
        %v636 = vrot.slane %v608, 4
        %v637 = vmax.f32 %v608, %v636
        %v638 = vrot.slane %v637, 2
        %v639 = vmax.f32 %v637, %v638
        %v640 = vrot.slane %v639, 1
        %v641 = vmax.f32 %v639, %v640
        %v642 = vrot.slane %v609, 4
        %v643 = vmax.f32 %v609, %v642
        %v644 = vrot.slane %v643, 2
        %v645 = vmax.f32 %v643, %v644
        %v646 = vrot.slane %v645, 1
        %v647 = vmax.f32 %v645, %v646
        %v648 = vrot.slane %v610, 4
        %v649 = vmax.f32 %v610, %v648
        %v650 = vrot.slane %v649, 2
        %v651 = vmax.f32 %v649, %v650
        %v652 = vrot.slane %v651, 1
        %v653 = vmax.f32 %v651, %v652
        %v654 = vrot.slane %v611, 4
        %v655 = vmax.f32 %v611, %v654
        %v656 = vrot.slane %v655, 2
        %v657 = vmax.f32 %v655, %v656
        %v658 = vrot.slane %v657, 1
        %v659 = vmax.f32 %v657, %v658
        %v660 = vsub.f32 %v604, %v617
        %v661 = vsub.f32 %v605, %v623
        %v662 = vsub.f32 %v606, %v629
        %v663 = vsub.f32 %v607, %v635
        %v664 = vsub.f32 %v608, %v641
        %v665 = vsub.f32 %v609, %v647
        %v666 = vsub.f32 %v610, %v653
        %v667 = vsub.f32 %v611, %v659
        %v668 = vmul.f32 %v660, 1.442695
        %v669 = vpow.pop %v668
        %v670 = vmul.f32 %v661, 1.442695
        %v671 = vpow.pop %v670
        %v672 = vmul.f32 %v662, 1.442695
        %v673 = vpow.pop %v672
        %v674 = vmul.f32 %v663, 1.442695
        %v675 = vpow.pop %v674
        %v676 = vmul.f32 %v664, 1.442695
        %v677 = vpow.pop %v676
        %v678 = vmul.f32 %v665, 1.442695
        %v679 = vpow.pop %v678
        %v680 = vmul.f32 %v666, 1.442695
        %v681 = vpow.pop %v680
        %v682 = vmul.f32 %v667, 1.442695
        %v683 = vpow.pop %v682
        %v684 = vrot.slane %v669, 4
        %v685 = vadd.f32 %v669, %v684
        %v686 = vrot.slane %v685, 2
        %v687 = vadd.f32 %v685, %v686
        %v688 = vrot.slane %v687, 1
        %v689 = vadd.f32 %v687, %v688
        %v690 = vrot.slane %v671, 4
        %v691 = vadd.f32 %v671, %v690
        %v692 = vrot.slane %v691, 2
        %v693 = vadd.f32 %v691, %v692
        %v694 = vrot.slane %v693, 1
        %v695 = vadd.f32 %v693, %v694
        %v696 = vrot.slane %v673, 4
        %v697 = vadd.f32 %v673, %v696
        %v698 = vrot.slane %v697, 2
        %v699 = vadd.f32 %v697, %v698
        %v700 = vrot.slane %v699, 1
        %v701 = vadd.f32 %v699, %v700
        %v702 = vrot.slane %v675, 4
        %v703 = vadd.f32 %v675, %v702
        %v704 = vrot.slane %v703, 2
        %v705 = vadd.f32 %v703, %v704
        %v706 = vrot.slane %v705, 1
        %v707 = vadd.f32 %v705, %v706
        %v708 = vrot.slane %v677, 4
        %v709 = vadd.f32 %v677, %v708
        %v710 = vrot.slane %v709, 2
        %v711 = vadd.f32 %v709, %v710
        %v712 = vrot.slane %v711, 1
        %v713 = vadd.f32 %v711, %v712
        %v714 = vrot.slane %v679, 4
        %v715 = vadd.f32 %v679, %v714
        %v716 = vrot.slane %v715, 2
        %v717 = vadd.f32 %v715, %v716
        %v718 = vrot.slane %v717, 1
        %v719 = vadd.f32 %v717, %v718
        %v720 = vrot.slane %v681, 4
        %v721 = vadd.f32 %v681, %v720
        %v722 = vrot.slane %v721, 2
        %v723 = vadd.f32 %v721, %v722
        %v724 = vrot.slane %v723, 1
        %v725 = vadd.f32 %v723, %v724
        %v726 = vrot.slane %v683, 4
        %v727 = vadd.f32 %v683, %v726
        %v728 = vrot.slane %v727, 2
        %v729 = vadd.f32 %v727, %v728
        %v730 = vrot.slane %v729, 1
        %v731 = vadd.f32 %v729, %v730
        %v732 = vrcp.pop %v689
        %v733 = vmul.f32 %v669, %v732
        %v734 = vrcp.pop %v695
        %v735 = vmul.f32 %v671, %v734
        %v736 = vrcp.pop %v701
        %v737 = vmul.f32 %v673, %v736
        %v738 = vrcp.pop %v707
        %v739 = vmul.f32 %v675, %v738
        %v740 = vrcp.pop %v713
        %v741 = vmul.f32 %v677, %v740
        %v742 = vrcp.pop %v719
        %v743 = vmul.f32 %v679, %v742
        %v744 = vrcp.pop %v725
        %v745 = vmul.f32 %v681, %v744
        %v746 = vrcp.pop %v731
        %v747 = vmul.f32 %v683, %v746
        %v748 = vmul.f32 %v733, %v473
        %v749 = vmul.f32 %v735, %v474
        %v750 = vmul.f32 %v737, %v475
        %v751 = vmul.f32 %v739, %v476
        %v752 = vmul.f32 %v741, %v477
        %v753 = vmul.f32 %v743, %v478
        %v754 = vmul.f32 %v745, %v479
        %v755 = vmul.f32 %v747, %v480
        %v756 = vsel %vm579, %v748, 0.0
        %v757 = vrot.slane %v756, 4
        %v758 = vadd.f32 %v756, %v757
        %v759 = vrot.slane %v758, 2
        %v760 = vadd.f32 %v758, %v759
        %v761 = vrot.slane %v760, 1
        %v762 = vadd.f32 %v760, %v761
        %v763 = vsel %vm579, %v749, 0.0
        %v764 = vrot.slane %v763, 4
        %v765 = vadd.f32 %v763, %v764
        %v766 = vrot.slane %v765, 2
        %v767 = vadd.f32 %v765, %v766
        %v768 = vrot.slane %v767, 1
        %v769 = vadd.f32 %v767, %v768
        %v770 = vsel %vm579, %v750, 0.0
        %v771 = vrot.slane %v770, 4
        %v772 = vadd.f32 %v770, %v771
        %v773 = vrot.slane %v772, 2
        %v774 = vadd.f32 %v772, %v773
        %v775 = vrot.slane %v774, 1
        %v776 = vadd.f32 %v774, %v775
        %v777 = vsel %vm579, %v751, 0.0
        %v778 = vrot.slane %v777, 4
        %v779 = vadd.f32 %v777, %v778
        %v780 = vrot.slane %v779, 2
        %v781 = vadd.f32 %v779, %v780
        %v782 = vrot.slane %v781, 1
        %v783 = vadd.f32 %v781, %v782
        %v784 = vsel %vm579, %v752, 0.0
        %v785 = vrot.slane %v784, 4
        %v786 = vadd.f32 %v784, %v785
        %v787 = vrot.slane %v786, 2
        %v788 = vadd.f32 %v786, %v787
        %v789 = vrot.slane %v788, 1
        %v790 = vadd.f32 %v788, %v789
        %v791 = vsel %vm579, %v753, 0.0
        %v792 = vrot.slane %v791, 4
        %v793 = vadd.f32 %v791, %v792
        %v794 = vrot.slane %v793, 2
        %v795 = vadd.f32 %v793, %v794
        %v796 = vrot.slane %v795, 1
        %v797 = vadd.f32 %v795, %v796
        %v798 = vsel %vm579, %v754, 0.0
        %v799 = vrot.slane %v798, 4
        %v800 = vadd.f32 %v798, %v799
        %v801 = vrot.slane %v800, 2
        %v802 = vadd.f32 %v800, %v801
        %v803 = vrot.slane %v802, 1
        %v804 = vadd.f32 %v802, %v803
        %v805 = vsel %vm579, %v755, 0.0
        %v806 = vrot.slane %v805, 4
        %v807 = vadd.f32 %v805, %v806
        %v808 = vrot.slane %v807, 2
        %v809 = vadd.f32 %v807, %v808
        %v810 = vrot.slane %v809, 1
        %v811 = vadd.f32 %v809, %v810
        %v812 = vrot.slane %v464, 1
        %v813 = vrot.slane %v464, 2
        %v814 = vrot.slane %v464, 3
        %v815 = vrot.slane %v464, 4
        %v816 = vrot.slane %v464, 5
        %v817 = vrot.slane %v464, 6
        %v818 = vrot.slane %v464, 7
        %v827 = vadd.f32 %v762, %v464
        %v828 = vadd.f32 %v769, %v812
        %v829 = vadd.f32 %v776, %v813
        %v830 = vadd.f32 %v783, %v814
        %v831 = vadd.f32 %v790, %v815
        %v832 = vadd.f32 %v797, %v816
        %v833 = vadd.f32 %v804, %v817
        %v834 = vadd.f32 %v811, %v818
        %v835 = vld [vmem:[%s7] sm:$0x1]
        %v836 = vld [vmem:[%s8] sm:$0x1]
        %v845 = vrot.slane %v828, 7
        %vm846 = vcmask 1041409
        %v847 = vsel %vm846, %v845, %v827
        %v848 = vrot.slane %v829, 6
        %vm849 = vcmask 1042434
        %v850 = vsel %vm849, %v848, %v847
        %v851 = vrot.slane %v830, 5
        %vm852 = vcmask 1043459
        %v853 = vsel %vm852, %v851, %v850
        %v854 = vrot.slane %v831, 4
        %vm855 = vcmask 1044484
        %v856 = vsel %vm855, %v854, %v853
        %v857 = vrot.slane %v832, 3
        %vm858 = vcmask 1045509
        %v859 = vsel %vm858, %v857, %v856
        %v860 = vrot.slane %v833, 2
        %vm861 = vcmask 1046534
        %v862 = vsel %vm861, %v860, %v859
        %v863 = vrot.slane %v834, 1
        %vm864 = vcmask 1047559
        %v865 = vsel %vm864, %v863, %v862
        %v867 = vsel %vm579, %v865, 0.0
        %868 = vadd.xlane.f32.xlu0 %v867
        %v869 = vpop.xlane.xlu0 %868
        %v870 = vrcp.pop 64.0
        %v871 = vmul.f32 %v869, %v870
        %v873 = vrot.slane %v871, 1
        %v874 = vrot.slane %v871, 2
        %v875 = vrot.slane %v871, 3
        %v876 = vrot.slane %v871, 4
        %v877 = vrot.slane %v871, 5
        %v878 = vrot.slane %v871, 6
        %v879 = vrot.slane %v871, 7
        %v888 = vsub.f32 %v827, %v871
        %v889 = vsub.f32 %v828, %v873
        %v890 = vsub.f32 %v829, %v874
        %v891 = vsub.f32 %v830, %v875
        %v892 = vsub.f32 %v831, %v876
        %v893 = vsub.f32 %v832, %v877
        %v894 = vsub.f32 %v833, %v878
        %v895 = vsub.f32 %v834, %v879
        %v896 = vmul.f32 %v888, %v888
        %v897 = vmul.f32 %v889, %v889
        %v898 = vmul.f32 %v890, %v890
        %v899 = vmul.f32 %v891, %v891
        %v900 = vmul.f32 %v892, %v892
        %v901 = vmul.f32 %v893, %v893
        %v902 = vmul.f32 %v894, %v894
        %v903 = vmul.f32 %v895, %v895
        %v912 = vrot.slane %v897, 7
        %v913 = vsel %vm846, %v912, %v896
        %v914 = vrot.slane %v898, 6
        %v915 = vsel %vm849, %v914, %v913
        %v916 = vrot.slane %v899, 5
        %v917 = vsel %vm852, %v916, %v915
        %v918 = vrot.slane %v900, 4
        %v919 = vsel %vm855, %v918, %v917
        %v920 = vrot.slane %v901, 3
        %v921 = vsel %vm858, %v920, %v919
        %v922 = vrot.slane %v902, 2
        %v923 = vsel %vm861, %v922, %v921
        %v924 = vrot.slane %v903, 1
        %v925 = vsel %vm864, %v924, %v923
        %v927 = vsel %vm579, %v925, 0.0
        %928 = vadd.xlane.f32.xlu0 %v927
        %v929 = vpop.xlane.xlu0 %928
        %v930 = vrcp.pop 63.0
        %v931 = vmul.f32 %v929, %v930
        %v932 = vrsqrt.pop %v931
        %v933 = vmul.f32 %v931, %v932
        %vm934 = vcmp.eq.f32.partialorder %v931, inf
        %v935 = vsel %vm934, %v931, %v933
        %vm936 = vcmp.eq.f32.partialorder %v931, 0.0
        %v937 = vand.u32 %v931, 2147483648
        %v938 = vsel %vm936, %v937, %v935
        %v940 = vlaneseq
        %v941 = vshrl.u32 %v940, 7
        %v942 = vsub.s32 0, %v941
        %v943 = vrot.slane %v835, %v942
        %v953 = vrot.slane %v889, 7
        %v954 = vsel %vm846, %v953, %v888
        %v955 = vrot.slane %v890, 6
        %v956 = vsel %vm849, %v955, %v954
        %v957 = vrot.slane %v891, 5
        %v958 = vsel %vm852, %v957, %v956
        %v959 = vrot.slane %v892, 4
        %v960 = vsel %vm855, %v959, %v958
        %v961 = vrot.slane %v893, 3
        %v962 = vsel %vm858, %v961, %v960
        %v963 = vrot.slane %v894, 2
        %v964 = vsel %vm861, %v963, %v962
        %v965 = vrot.slane %v895, 1
        %v966 = vsel %vm864, %v965, %v964
        %v968 = vmul.f32 %v943, %v966
        %v969 = vadd.f32 %v938, 1e-06
        %v970 = vrcp.pop %v969
        %v971 = vmul.f32 %v968, %v970
        %v973 = vlaneseq
        %v974 = vshrl.u32 %v973, 7
        %v975 = vsub.s32 0, %v974
        %v976 = vrot.slane %v836, %v975
        %v978 = vadd.f32 %v971, %v976
        %v979 = vld [vmem:[%s3] sm:$0xff]
        %v980 = vld [vmem:[%s3 + $0x8] sm:$0xff]
        %v981 = vld [vmem:[%s3 + $0x10] sm:$0xff]
        %v982 = vld [vmem:[%s3 + $0x18] sm:$0xff]
        %v983 = vld [vmem:[%s3 + $0x20] sm:$0xff]
        %v984 = vld [vmem:[%s3 + $0x28] sm:$0xff]
        %v985 = vld [vmem:[%s3 + $0x30] sm:$0xff]
        %v986 = vld [vmem:[%s3 + $0x38] sm:$0xff]
        %v987 = vld [vmem:[%s4] sm:$0x1]
        %v989 = vlaneseq
        %v990 = vshrl.u32 %v989, 7
        %v991 = vsub.s32 0, %v990
        %v992 = vrot.slane %v987, %v991
        %v995 = vsel %vm579, %v978, 0
        %997 = vmatprep.subr.mxu0 0.0
        %998 = vmatpush1.msra.mxu0 %v979
        %999 = vmatprep.subr.mxu0 0.0
        %1000 = vmatpush1.msra.mxu0 %v980
        %1001 = vmatprep.subr.mxu0 0.0
        %1002 = vmatpush1.msra.mxu0 %v981
        %1003 = vmatprep.subr.mxu0 0.0
        %1004 = vmatpush1.msra.mxu0 %v982
        %1005 = vmatprep.subr.mxu0 0.0
        %1006 = vmatpush1.msra.mxu0 %v983
        %1007 = vmatprep.subr.mxu0 0.0
        %1008 = vmatpush1.msra.mxu0 %v984
        %1009 = vmatprep.subr.mxu0 0.0
        %1010 = vmatpush1.msra.mxu0 %v985
        %1011 = vmatprep.subr.mxu0 0.0
        %1012 = vmatpush1.msra.mxu0 %v986
        %1013 = vmatprep.subr.mxu0 0.0
        %1014 = vmatpush1.msra.mxu0 0.0
        %1015 = vmatprep.subr.mxu0 0.0
        %1016 = vmatpush1.msra.mxu0 0.0
        %1017 = vmatprep.subr.mxu0 0.0
        %1018 = vmatpush1.msra.mxu0 0.0
        %1019 = vmatprep.subr.mxu0 0.0
        %1020 = vmatpush1.msra.mxu0 0.0
        %1021 = vmatprep.subr.mxu0 0.0
        %1022 = vmatpush1.msra.mxu0 0.0
        %1023 = vmatprep.subr.mxu0 0.0
        %1024 = vmatpush1.msra.mxu0 0.0
        %1025 = vmatprep.subr.mxu0 0.0
        %1026 = vmatpush1.msra.mxu0 0.0
        %1027 = vmatprep.subr.mxu0 0.0
        %1028 = vmatpush1.msra.mxu0 0.0
        %1029 = vmatprep.subr.mxu0 0.0
        %1030 = vmatpush1.msra.mxu0 0.0
        %1031 = vmatprep.subr.mxu0 0.0
        %1032 = vmatpush1.msra.mxu0 0.0
        %1033 = vmatprep.subr.mxu0 0.0
        %1034 = vmatpush1.msra.mxu0 0.0
        %1035 = vmatprep.subr.mxu0 0.0
        %1036 = vmatpush1.msra.mxu0 0.0
        %1037 = vmatprep.subr.mxu0 0.0
        %1038 = vmatpush1.msra.mxu0 0.0
        %1039 = vmatprep.subr.mxu0 0.0
        %1040 = vmatpush1.msra.mxu0 0.0
        %1041 = vmatprep.subr.mxu0 0.0
        %1042 = vmatpush1.msra.mxu0 0.0
        %1043 = vmatprep.subr.mxu0 0.0
        %1044 = vmatpush1.msra.mxu0 0.0
        %1045 = vmatprep.subr.mxu0 0.0
        %1046 = vmatpush1.msra.mxu0 0.0
        %1047 = vmatprep.subr.mxu0 0.0
        %1048 = vmatpush1.msra.mxu0 0.0
        %1049 = vmatprep.subr.mxu0 0.0
        %1050 = vmatpush1.msra.mxu0 0.0
        %1051 = vmatprep.subr.mxu0 0.0
        %1052 = vmatpush1.msra.mxu0 0.0
        %1053 = vmatprep.subr.mxu0 0.0
        %1054 = vmatpush1.msra.mxu0 0.0
        %1055 = vmatprep.subr.mxu0 0.0
        %1056 = vmatpush1.msra.mxu0 0.0
        %1057 = vmatprep.subr.mxu0 0.0
        %1058 = vmatpush1.msra.mxu0 0.0
        %1059 = vmatprep.subr.mxu0 0.0
        %1060 = vmatpush1.msra.mxu0 0.0
        %1061 = vmatprep.mubr.f32.mxu0 0.0
        %1062 = vmatmul.mubr.f32.gmra.mrb[0].mxu0 %v995
        %v1063 = vpop.f32.mrb[0].mxu0
        %v1064 = vadd.f32 %v992, %v1063
        %v1065 = vpop.f32.mrb[0].mxu0
        %1066 = vdwg.mxu0
        %v1067 = vmax.f32 %v1064, 0.0
        %v1068 = vld [vmem:[%s5] sm:$0xff]
        %v1069 = vld [vmem:[%s5 + $0x8] sm:$0xff]
        %v1070 = vld [vmem:[%s5 + $0x10] sm:$0xff]
        %v1071 = vld [vmem:[%s5 + $0x18] sm:$0xff]
        %v1072 = vld [vmem:[%s6] sm:$0x1]
        %v1074 = vlaneseq
        %v1075 = vshrl.u32 %v1074, 7
        %v1076 = vsub.s32 0, %v1075
        %v1077 = vrot.slane %v1072, %v1076
        %vm1079 = vcmask 261120
        %v1081 = vsel %vm1079, %v1067, 0
        %1083 = vmatprep.subr.mxu0 0.0
        %1084 = vmatpush1.msra.mxu0 %v1068
        %1085 = vmatprep.subr.mxu0 0.0
        %1086 = vmatpush1.msra.mxu0 %v1069
        %1087 = vmatprep.subr.mxu0 0.0
        %1088 = vmatpush1.msra.mxu0 %v1070
        %1089 = vmatprep.subr.mxu0 0.0
        %1090 = vmatpush1.msra.mxu0 %v1071
        %1091 = vmatprep.subr.mxu0 0.0
        %1092 = vmatpush1.msra.mxu0 0.0
        %1093 = vmatprep.subr.mxu0 0.0
        %1094 = vmatpush1.msra.mxu0 0.0
        %1095 = vmatprep.subr.mxu0 0.0
        %1096 = vmatpush1.msra.mxu0 0.0
        %1097 = vmatprep.subr.mxu0 0.0
        %1098 = vmatpush1.msra.mxu0 0.0
        %1099 = vmatprep.subr.mxu0 0.0
        %1100 = vmatpush1.msra.mxu0 0.0
        %1101 = vmatprep.subr.mxu0 0.0
        %1102 = vmatpush1.msra.mxu0 0.0
        %1103 = vmatprep.subr.mxu0 0.0
        %1104 = vmatpush1.msra.mxu0 0.0
        %1105 = vmatprep.subr.mxu0 0.0
        %1106 = vmatpush1.msra.mxu0 0.0
        %1107 = vmatprep.subr.mxu0 0.0
        %1108 = vmatpush1.msra.mxu0 0.0
        %1109 = vmatprep.subr.mxu0 0.0
        %1110 = vmatpush1.msra.mxu0 0.0
        %1111 = vmatprep.subr.mxu0 0.0
        %1112 = vmatpush1.msra.mxu0 0.0
        %1113 = vmatprep.subr.mxu0 0.0
        %1114 = vmatpush1.msra.mxu0 0.0
        %1115 = vmatprep.subr.mxu0 0.0
        %1116 = vmatpush1.msra.mxu0 0.0
        %1117 = vmatprep.subr.mxu0 0.0
        %1118 = vmatpush1.msra.mxu0 0.0
        %1119 = vmatprep.subr.mxu0 0.0
        %1120 = vmatpush1.msra.mxu0 0.0
        %1121 = vmatprep.subr.mxu0 0.0
        %1122 = vmatpush1.msra.mxu0 0.0
        %1123 = vmatprep.subr.mxu0 0.0
        %1124 = vmatpush1.msra.mxu0 0.0
        %1125 = vmatprep.subr.mxu0 0.0
        %1126 = vmatpush1.msra.mxu0 0.0
        %1127 = vmatprep.subr.mxu0 0.0
        %1128 = vmatpush1.msra.mxu0 0.0
        %1129 = vmatprep.subr.mxu0 0.0
        %1130 = vmatpush1.msra.mxu0 0.0
        %1131 = vmatprep.subr.mxu0 0.0
        %1132 = vmatpush1.msra.mxu0 0.0
        %1133 = vmatprep.subr.mxu0 0.0
        %1134 = vmatpush1.msra.mxu0 0.0
        %1135 = vmatprep.subr.mxu0 0.0
        %1136 = vmatpush1.msra.mxu0 0.0
        %1137 = vmatprep.subr.mxu0 0.0
        %1138 = vmatpush1.msra.mxu0 0.0
        %1139 = vmatprep.subr.mxu0 0.0
        %1140 = vmatpush1.msra.mxu0 0.0
        %1141 = vmatprep.subr.mxu0 0.0
        %1142 = vmatpush1.msra.mxu0 0.0
        %1143 = vmatprep.subr.mxu0 0.0
        %1144 = vmatpush1.msra.mxu0 0.0
        %1145 = vmatprep.subr.mxu0 0.0
        %1146 = vmatpush1.msra.mxu0 0.0
        %1147 = vmatprep.mubr.f32.mxu0 0.0
        %1148 = vmatmul.mubr.f32.gmra.mrb[0].mxu0 %v1081
        %v1149 = vpop.f32.mrb[0].mxu0
        %v1150 = vadd.f32 %v1077, %v1149
        %v1151 = vpop.f32.mrb[0].mxu0
        %1152 = vdwg.mxu0
        %v1153 = vadd.f32 %v978, %v1150
        %v1154 = vld [vmem:[%s9] sm:$0x1]
        %v1155 = vld [vmem:[%s10] sm:$0x1]
        %v1156 = vsel %vm579, %v1153, 0.0
        %1157 = vadd.xlane.f32.xlu0 %v1156
        %v1158 = vpop.xlane.xlu0 %1157
        %v1159 = vmul.f32 %v1158, %v870
        %v1160 = vsub.f32 %v1153, %v1159
        %v1161 = vmul.f32 %v1160, %v1160
        %v1162 = vsel %vm579, %v1161, 0.0
        %1163 = vadd.xlane.f32.xlu0 %v1162
        %v1164 = vpop.xlane.xlu0 %1163
        %v1165 = vmul.f32 %v1164, %v930
        %v1166 = vrsqrt.pop %v1165
        %v1167 = vmul.f32 %v1165, %v1166
        %vm1168 = vcmp.eq.f32.partialorder %v1165, inf
        %v1169 = vsel %vm1168, %v1165, %v1167
        %vm1170 = vcmp.eq.f32.partialorder %v1165, 0.0
        %v1171 = vand.u32 %v1165, 2147483648
        %v1172 = vsel %vm1170, %v1171, %v1169
        %v1174 = vlaneseq
        %v1175 = vshrl.u32 %v1174, 7
        %v1176 = vsub.s32 0, %v1175
        %v1177 = vrot.slane %v1154, %v1176
        %v1179 = vmul.f32 %v1177, %v1160
        %v1180 = vadd.f32 %v1172, 1e-06
        %v1181 = vrcp.pop %v1180
        %v1182 = vmul.f32 %v1179, %v1181
        %v1184 = vlaneseq
        %v1185 = vshrl.u32 %v1184, 7
        %v1186 = vsub.s32 0, %v1185
        %v1187 = vrot.slane %v1155, %v1186
        %v1189 = vadd.f32 %v1182, %v1187
        %1190 = vst.msk [vmem:[%s457] sm:$0xff] %vm579, %v1189
        %s1191 = sand.u32 %s285, 1
        %s1192 = scalar_lea.sflag [#allocation4], %s1191
        %s1193 = sand.u32 %s285, 1
        %s1194 = smul.addr %s1193, 8
        %s1195 = scalar_lea.vmem [#allocation7], %s1194
        // Predicated region
        $region73: #{tpu_custom_call.1} parent=63 // pred_check
          %p1196 = pneg %p295
        $region74: #{tpu_custom_call.1} parent=63 // pred_check_branch
          %1198 = sbr.rel (%p1196) target = $region76
        $region75: #{tpu_custom_call.1} parent=63 // pred_region
          %s1200 = ssub.s32 128, 128
          %1201 = vsyncadd %s1192, %s1200
          %s1202 = smul.addr %s31, 128
          %s1203 = scalar_lea.hbm %s11, %s1202
          %s1205 = sshll.u32 %s1195, 4
          %s1206 = int_to_ptr.vmem [resolvable:$true] %s1205
          %1208 = dma.vmem_to_hbm [thread:$0]  %s1206, 128, %s1203, %s1192
        $region76: #{tpu_custom_call.1} parent=63 // pred_fallthru
          _
      $region64: #{tpu_custom_call.1} parent=5 // pred_fallthru
        _
      %p1209 = scmp.le.s32.totalorder 2, %s26
      // Predicated region
      $region77: #{tpu_custom_call.1} parent=5 // pred_check
        %p1210 = pneg %p1209
      $region78: #{tpu_custom_call.1} parent=5 // pred_check_branch
        %1212 = sbr.rel (%p1210) target = $region80
      $region79: #{tpu_custom_call.1} parent=5 // pred_region
        %s1213 = ssub.s32 %s26, 2
        // Predicated region
        $region81: #{tpu_custom_call.1} parent=79 // pred_check
          %p1214 = pneg %p301
        $region82: #{tpu_custom_call.1} parent=79 // pred_check_branch
          %1216 = sbr.rel (%p1214) target = $region84
        $region83: #{tpu_custom_call.1} parent=79 // pred_region
          %s1217 = sand.u32 %s286, 1
          %s1218 = scalar_lea.sflag [#allocation4], %s1217
          %s1219 = sand.u32 %s286, 1
          %s1220 = smul.addr %s1219, 8
          %s1221 = scalar_lea.vmem [#allocation7], %s1220
          %1222 = dma.done %s1218, 128
        $region84: #{tpu_custom_call.1} parent=79 // pred_fallthru
          _
      $region80: #{tpu_custom_call.1} parent=5 // pred_fallthru
        _
    $region6: #{tpu_custom_call.1} parent=1 // loop_footer
      %s30 = sadd.s32 1, %s26
    $region7: #{tpu_custom_call.1} parent=1 // loop_footer_branch
      %25 = sbr.rel target = $region3
    $region8: #{tpu_custom_call.1} parent=1 // loop_exit
      _
    %1223 = vsyncpa [#allocation3], 1
    %s1224 = scalar_lea.sflag [#allocation3], 1
    %1225 = vsyncpa %s1224, 1
    %1226 = vsyncpa [#allocation6], 1
    %s1227 = scalar_lea.sflag [#allocation6], 1
    %1228 = vsyncpa %s1227, 1
    %1229 = vsyncpa [#allocation4], 1
    %s1230 = scalar_lea.sflag [#allocation4], 1
    %1231 = vsyncpa %s1230, 1

</llo_original>
